<compile_context>
chip_gen: v7x
topology: tpu7x:2x2x1
jax: 0.10.0
libtpu: 0.0.40
codegen_flags: <defaults>
</compile_context>

<pallas_src>
import functools

import jax
import jax.numpy as jnp
from jax.experimental import pallas as pl
from jax.experimental.pallas import tpu as pltpu

_LANE_CANDIDATES = (1024, 512, 256, 128)   # wide lane-dense slabs preferred
_DEFAULT_LANE = 512
_BLOCK_BYTES = 2 * 1024 * 1024             # ~2 MiB per block (mem-bound sweet spot)
_VMEM_LIMIT = 32 * 1024 * 1024             # safe scoped VMEM on v5e/v6e/v7x


def _sublane_multiple(dtype):
    itemsize = jnp.dtype(dtype).itemsize
    return {4: 8, 2: 16, 1: 32}.get(itemsize, 8)


def _plan(n, dtype):
    """Choose lane width / padding / rows / row-block / grid for the 2-D slab."""
    itemsize = jnp.dtype(dtype).itemsize
    sub = _sublane_multiple(dtype)

    lane = None
    for w in _LANE_CANDIDATES:              # largest lane width that avoids padding
        if n % w == 0:
            lane = w
            break
    if lane is None:
        lane = _DEFAULT_LANE
    pad = (-n) % lane
    rows = (n + pad) // lane

    # ~2 MiB blocks, rounded down to the dtype's sublane multiple.
    target_rows = max(sub, (_BLOCK_BYTES // (lane * itemsize)) // sub * sub)
    if rows <= target_rows:
        row_block = rows                    # single full-extent block (always legal)
    else:
        row_block = target_rows
    grid_rows = -(-rows // row_block)
    return lane, pad, rows, row_block, grid_rows


# ----------------------------- kernels ------------------------------------ #
def _minmax_kernel(x_ref, min_ref, max_ref, *, row_block, valid_rows, needs_mask):
    """Per-block partial min/max (f32) written to SMEM scalar output blocks."""
    x = x_ref[...].astype(jnp.float32)
    if needs_mask:
        # Last grid block may read rows beyond the array; mask them out.
        row = pl.program_id(0) * row_block + jax.lax.broadcasted_iota(
            jnp.int32, x.shape, 0
        )
        ok = row < valid_rows
        min_ref[0, 0] = jnp.min(jnp.where(ok, x, jnp.inf))
        max_ref[0, 0] = jnp.max(jnp.where(ok, x, -jnp.inf))
    else:
        min_ref[0, 0] = jnp.min(x)
        max_ref[0, 0] = jnp.max(x)


def _apply_kernel(ss_ref, x_ref, o_ref):
    """Elementwise y = x * scale + shift; scale/shift are (2,) f32 SMEM scalars."""
    scale = ss_ref[0]
    shift = ss_ref[1]
    o_ref[...] = (x_ref[...].astype(jnp.float32) * scale + shift).astype(o_ref.dtype)


# ----------------------------- wrappers ------------------------------------ #
def _partial_minmax(x2d, row_block, grid_rows):
    rows, lane = x2d.shape
    needs_mask = (rows % row_block) != 0
    kernel = functools.partial(
        _minmax_kernel, row_block=row_block, valid_rows=rows, needs_mask=needs_mask
    )
    return pl.pallas_call(
        kernel,
        out_shape=(
            jax.ShapeDtypeStruct((grid_rows, 1), jnp.float32),
            jax.ShapeDtypeStruct((grid_rows, 1), jnp.float32),
        ),
        grid=(grid_rows,),
        in_specs=[pl.BlockSpec((row_block, lane), lambda i: (i, 0))],
        out_specs=(
            pl.BlockSpec((1, 1), lambda i: (i, 0), memory_space=pltpu.SMEM),
            pl.BlockSpec((1, 1), lambda i: (i, 0), memory_space=pltpu.SMEM),
        ),
        compiler_params=pltpu.CompilerParams(
            dimension_semantics=("parallel",),
            vmem_limit_bytes=_VMEM_LIMIT,
        ),
    )(x2d)


def _apply(x2d, scale_shift, row_block, grid_rows):
    rows, lane = x2d.shape
    return pl.pallas_call(
        _apply_kernel,
        out_shape=jax.ShapeDtypeStruct(x2d.shape, x2d.dtype),
        grid=(grid_rows,),
        in_specs=[
            pl.BlockSpec(memory_space=pltpu.SMEM),                  # (2,) scalars
            pl.BlockSpec((row_block, lane), lambda i: (i, 0)),
        ],
        out_specs=pl.BlockSpec((row_block, lane), lambda i: (i, 0)),
        compiler_params=pltpu.CompilerParams(
            dimension_semantics=("parallel",),
            vmem_limit_bytes=_VMEM_LIMIT,
        ),
    )(scale_shift, x2d)


class NormalizeRange:
    """JAX/Pallas port of the PyTorch NormalizeRange module (forward pass)."""

    def __init__(self, output_range, input_range=None, eps=1e-6):
        self.output_range = output_range
        self.input_range = input_range
        self.eps = eps
        self.fixed_input_range = input_range is not None
        if self.fixed_input_range:
            self.scale, self.shift = self._get_scale_shift(input_range, output_range)

    def _get_scale_shift(self, input_range, output_range):
        scale = (output_range[1] - output_range[0]) / (
            input_range[1] - input_range[0] + self.eps
        )
        shift = output_range[0] - input_range[0] * scale
        return scale, shift

    def __call__(self, x):
        orig_shape = x.shape
        n = int(x.size)
        if n == 0:
            return x

        lane, pad, rows, row_block, grid_rows = _plan(n, x.dtype)
        flat = x.reshape(-1)
        if pad:
            # TODO(synk): handle ragged (n % 128 != 0) tails in-kernel to avoid
            # this full-tensor pad copy; padding replicates flat[0] so the
            # global min/max is unaffected.
            flat = jnp.concatenate([flat, jnp.broadcast_to(flat[0], (pad,))])
        x2d = flat.reshape(rows, lane)

        if self.fixed_input_range:
            scale_shift = jnp.array([self.scale, self.shift], dtype=jnp.float32)
        else:
            pmin, pmax = _partial_minmax(x2d, row_block, grid_rows)
            x_min = jnp.min(pmin)                     # tiny (grid_rows,1) reduce
            x_max = jnp.max(pmax)
            out_lo = jnp.float32(self.output_range[0])
            out_hi = jnp.float32(self.output_range[1])
            scale = (out_hi - out_lo) / (x_max - x_min + jnp.float32(self.eps))
            shift = out_lo - x_min * scale
            scale_shift = jnp.stack([scale, shift]).astype(jnp.float32)

        y2d = _apply(x2d, scale_shift, row_block, grid_rows)
        if pad:
            return y2d.reshape(-1)[:n].reshape(orig_shape)
        return y2d.reshape(orig_shape)


# ----------------------------- reference ----------------------------------- #
def _reference(x, output_range, input_range, eps):
    if input_range is not None:
        lo, hi = input_range
    else:
        lo, hi = jnp.min(x), jnp.max(x)
    scale = (output_range[1] - output_range[0]) / (hi - lo + eps)
    shift = output_range[0] - lo * scale
    return x * scale + shift


if __name__ == "__main__":
    key = jax.random.PRNGKey(0)
    # NCHW input, small shapes: batch=2, channels=4, spatial=16
    x = jax.random.uniform(
        key, (2, 4, 16, 16), dtype=jnp.float32, minval=-3.0, maxval=5.0
    )

    # Dynamic input range (partial min/max in-kernel, scalar glue in JAX)
    norm_dyn = NormalizeRange(output_range=[-1.0, 1.0], input_range=None)
    y_dyn = jax.block_until_ready(norm_dyn(x))
    y_dyn_ref = _reference(x, [-1.0, 1.0], None, 1e-6)

    # Fixed input range (precomputed scale/shift, same apply kernel)
    norm_fix = NormalizeRange(output_range=[0.0, 1.0], input_range=[-3.0, 5.0])
    y_fix = jax.block_until_ready(norm_fix(x))
    y_fix_ref = _reference(x, [0.0, 1.0], [-3.0, 5.0], 1e-6)

    assert y_dyn.shape == x.shape and y_fix.shape == x.shape
    assert jnp.allclose(y_dyn, y_dyn_ref, atol=1e-5, rtol=1e-5)
    assert jnp.allclose(y_fix, y_fix_ref, atol=1e-5, rtol=1e-5)

    print("KERNEL_OK")
</pallas_src>

<mosaic_0001>
module attributes {stable_mosaic.version = 11 : i64} {
  func.func @_minmax_kernel(%arg0: i32, %arg1: memref<2x1024xf32, #tpu.memory_space<vmem>>, %arg2: memref<1x1xf32, #tpu.memory_space<smem>>, %arg3: memref<1x1xf32, #tpu.memory_space<smem>>) attributes {dimension_semantics = [#tpu.dimension_semantics<parallel>], iteration_bounds = array<i64: 1>, scalar_prefetch = 0 : i64, scratch_operands = 0 : i64, tpu.core_type = #tpu.core_type<tc>, window_params = [{transform_indices = @transform_0, window_bounds = array<i64: 2, 1024>}, {transform_indices = @transform_1, window_bounds = array<i64: 1, 1>}, {transform_indices = @transform_2, window_bounds = array<i64: 1, 1>}]} {
    %c0 = arith.constant 0 : index
    %c0_0 = arith.constant 0 : index
    %0 = vector.load %arg1[%c0, %c0_0] : memref<2x1024xf32, #tpu.memory_space<vmem>>, vector<2x1024xf32>
    %1 = vector.shape_cast %0 : vector<2x1024xf32> to vector<1x2x1024xf32>
    %cst = arith.constant dense<0x7F800000> : vector<1xf32>
    %2 = vector.multi_reduction <minimumf>, %1, %cst [1, 2] : vector<1x2x1024xf32> to vector<1xf32>
    %3 = vector.shape_cast %2 : vector<1xf32> to vector<1x1x1xf32>
    %4 = vector.extract %3[0, 0, 0] : f32 from vector<1x1x1xf32>
    %c0_1 = arith.constant 0 : index
    %c0_2 = arith.constant 0 : index
    %5 = memref.load %arg2[%c0_1, %c0_2] : memref<1x1xf32, #tpu.memory_space<smem>>
    memref.store %4, %arg2[%c0_1, %c0_2] : memref<1x1xf32, #tpu.memory_space<smem>>
    %6 = vector.shape_cast %0 : vector<2x1024xf32> to vector<1x2x1024xf32>
    %cst_3 = arith.constant dense<0xFF800000> : vector<1xf32>
    %7 = vector.multi_reduction <maximumf>, %6, %cst_3 [1, 2] : vector<1x2x1024xf32> to vector<1xf32>
    %8 = vector.shape_cast %7 : vector<1xf32> to vector<1x1x1xf32>
    %9 = vector.extract %8[0, 0, 0] : f32 from vector<1x1x1xf32>
    %c0_4 = arith.constant 0 : index
    %c0_5 = arith.constant 0 : index
    %10 = memref.load %arg3[%c0_4, %c0_5] : memref<1x1xf32, #tpu.memory_space<smem>>
    memref.store %9, %arg3[%c0_4, %c0_5] : memref<1x1xf32, #tpu.memory_space<smem>>
    return
  }
  func.func @transform_0(%arg0: i32) -> (i32, i32) {
    %c0_i32 = arith.constant 0 : i32
    %c0_i32_0 = arith.constant 0 : i32
    return %arg0, %c0_i32 : i32, i32
  }
  func.func @transform_1(%arg0: i32) -> (i32, i32) {
    %c0_i32 = arith.constant 0 : i32
    %c0_i32_0 = arith.constant 0 : i32
    return %arg0, %c0_i32 : i32, i32
  }
  func.func @transform_2(%arg0: i32) -> (i32, i32) {
    %c0_i32 = arith.constant 0 : i32
    %c0_i32_0 = arith.constant 0 : i32
    return %arg0, %c0_i32 : i32, i32
  }
}

</mosaic_0001>

<llo_original>
// kernel: tpu_custom_call.1
$region0: #{tpu_custom_call.1}
  #allocation0 [shape = 'u32[]', space=smem, size = 0x4, offset = 0x4, fixed_abs, tag = 'smem constant byte address 0x4 - core index']
  #allocation1 [shape = 'u32[144,128]{1,0:T(1,128)}', space=vmem, size = 0x12000, scoped, tag = 'internal scratch']
  %s0 = inlined_call_operand.hbm [shape: f32[2,1024], index: 0, kind: input, shape index: {}]
  %s1 = inlined_call_operand.hbm [shape: f32[1,1], index: 1, kind: output, shape index: {0}]
  %s2 = inlined_call_operand.hbm [shape: f32[1,1], index: 2, kind: output, shape index: {1}]
  %3 = xla_tuple %s1, %s2
  %s4 = sld [smem:[#allocation0]]
  $region26: #{tpu_custom_call.1} parent=0
    _
  %s6 = ssub.s32 1, %s4
  %s7 = scalar_select 0, %s6, %s4
  $region1: #{tpu_custom_call.1} parent=0
    #allocation2 [shape = 'u8[8192]{0}', space=vmem, size = 0x2000, scoped, tag = 'input window, operand 0, single buffered']
    #allocation3 [shape = 's32[1]{0}', space=sflag, size = 0x4, scoped, tag = 'scoped memory for tpu_custom_call.1']
    #allocation4 [shape = 's32[1]{0}', space=sflag, size = 0x4, scoped, tag = 'scoped memory for tpu_custom_call.1']
    #allocation5 [shape = 'u8[512]{0}', space=smem, size = 0x200, scoped, tag = 'output window, operand 0, single buffered']
    #allocation6 [shape = 'u8[512]{0}', space=smem, size = 0x200, scoped, tag = 'output window, operand 1, single buffered']
    #allocation7 [shape = 's32[1]{0}', space=sflag, size = 0x4, scoped, tag = 'scoped memory for tpu_custom_call.1']
    %8 = vsyncpa [#allocation3], 0
    %9 = vsyncpa [#allocation4], 0
    %10 = vsyncpa [#allocation7], 0
    // Predicated region
    $region2: #{tpu_custom_call.1} parent=1 // pred_check
      _
    $region3: #{tpu_custom_call.1} parent=1 // pred_check_branch
      %12 = sbr.rel (0) target = $region5
    $region4: #{tpu_custom_call.1} parent=1 // pred_region
      %s14 = ssub.s32 256, 256
      %15 = vsyncadd [#allocation3], %s14
      %s17 = sshll.u32 [#allocation2], 4
      %s18 = int_to_ptr.vmem [resolvable:$true] %s17
      %20 = dma.hbm_to_vmem [thread:$0]  %s0, 256, %s18, [#allocation3]
    $region5: #{tpu_custom_call.1} parent=1 // pred_fallthru
      _
    // Predicated region
    $region6: #{tpu_custom_call.1} parent=1 // pred_check
      _
    $region7: #{tpu_custom_call.1} parent=1 // pred_check_branch
      %22 = sbr.rel (0) target = $region9
    $region8: #{tpu_custom_call.1} parent=1 // pred_region
      %23 = dma.done [#allocation3], 256
    $region9: #{tpu_custom_call.1} parent=1 // pred_fallthru
      _
    %v24 = vld [vmem:[#allocation2] sm:$0xff]
    %v25 = vld [vmem:[#allocation2 + $0x8] sm:$0xff]
    %v28 = vcombine.high %v24, %v24
    %v30 = vunpack.c.l.s4 1983009808
    %v31 = vunpack.c.0.s8 %v30
    %v32 = vlaneseq
    %v33 = vshrl.u32 %v32, 7
    %v34 = vsub.s32 %v31, %v33
    %v35 = vrot.slane %v24, %v34
    %v37 = vunpack.c.l.s4 1983009808
    %v38 = vunpack.c.0.s8 %v37
    %v39 = vlaneseq
    %v40 = vshrl.u32 %v39, 7
    %v41 = vsub.s32 %v38, %v40
    %v42 = vrot.slane %v28, %v41
    %v43 = vcombine.high %v35, %v35
    %v44 = vcombine.high %v42, %v42
    %v45 = vcombine.high %v25, %v25
    %v47 = vunpack.c.l.s4 1983009808
    %v48 = vunpack.c.0.s8 %v47
    %v49 = vlaneseq
    %v50 = vshrl.u32 %v49, 7
    %v51 = vsub.s32 %v48, %v50
    %v52 = vrot.slane %v25, %v51
    %v54 = vunpack.c.l.s4 1983009808
    %v55 = vunpack.c.0.s8 %v54
    %v56 = vlaneseq
    %v57 = vshrl.u32 %v56, 7
    %v58 = vsub.s32 %v55, %v57
    %v59 = vrot.slane %v45, %v58
    %v60 = vcombine.high %v52, %v52
    %v61 = vcombine.high %v59, %v59
    %vm70 = vcmask 1041408
    %v71 = vsel %vm70, %v35, inf
    %v72 = vsel %vm70, %v43, inf
    %v73 = vsel %vm70, %v42, inf
    %v74 = vsel %vm70, %v44, inf
    %v75 = vsel %vm70, %v52, inf
    %v76 = vmin.f32 %v71, %v75
    %v77 = vsel %vm70, %v60, inf
    %v78 = vmin.f32 %v72, %v77
    %v79 = vsel %vm70, %v59, inf
    %v80 = vmin.f32 %v73, %v79
    %v81 = vsel %vm70, %v61, inf
    %v82 = vmin.f32 %v74, %v81
    %v83 = vmin.f32 %v76, %v78
    %v84 = vmin.f32 %v80, %v82
    %v85 = vmin.f32 %v83, %v84
    %86 = vmin.xlane.f32.xlu0 %v85
    %v87 = vpop.xlane.xlu0 %86
    %v88 = vrot.slane %v87, 4
    %v89 = vmin.f32 %v87, %v88
    %v90 = vrot.slane %v89, 2
    %v91 = vmin.f32 %v89, %v90
    %v92 = vrot.slane %v91, 1
    %v93 = vmin.f32 %v91, %v92
    %s94 = vtos %v93
    %s95 = scalar_lea.smem [#allocation5], 0
    %96 = sst [smem:[%s95]] %s94
    %v97 = vsel %vm70, %v35, -inf
    %v98 = vsel %vm70, %v43, -inf
    %v99 = vsel %vm70, %v42, -inf
    %v100 = vsel %vm70, %v44, -inf
    %v101 = vsel %vm70, %v52, -inf
    %v102 = vmax.f32 %v97, %v101
    %v103 = vsel %vm70, %v60, -inf
    %v104 = vmax.f32 %v98, %v103
    %v105 = vsel %vm70, %v59, -inf
    %v106 = vmax.f32 %v99, %v105
    %v107 = vsel %vm70, %v61, -inf
    %v108 = vmax.f32 %v100, %v107
    %v109 = vmax.f32 %v102, %v104
    %v110 = vmax.f32 %v106, %v108
    %v111 = vmax.f32 %v109, %v110
    %112 = vmax.xlane.f32.xlu0 %v111
    %v113 = vpop.xlane.xlu0 %112
    %v114 = vrot.slane %v113, 4
    %v115 = vmax.f32 %v113, %v114
    %v116 = vrot.slane %v115, 2
    %v117 = vmax.f32 %v115, %v116
    %v118 = vrot.slane %v117, 1
    %v119 = vmax.f32 %v117, %v118
    %s120 = vtos %v119
    %s121 = scalar_lea.smem [#allocation6], 0
    %122 = sst [smem:[%s121]] %s120
    // Predicated region
    $region10: #{tpu_custom_call.1} parent=1 // pred_check
      _
    $region11: #{tpu_custom_call.1} parent=1 // pred_check_branch
      %124 = sbr.rel (0) target = $region13
    $region12: #{tpu_custom_call.1} parent=1 // pred_region
      %s126 = ssub.s32 16, 16
      %127 = vsyncadd [#allocation4], %s126
      %130 = dma.smem_to_hbm [#allocation5], 16, %s1, [#allocation4]
    $region13: #{tpu_custom_call.1} parent=1 // pred_fallthru
      _
    // Predicated region
    $region14: #{tpu_custom_call.1} parent=1 // pred_check
      _
    $region15: #{tpu_custom_call.1} parent=1 // pred_check_branch
      %132 = sbr.rel (0) target = $region17
    $region16: #{tpu_custom_call.1} parent=1 // pred_region
      %s134 = ssub.s32 16, 16
      %135 = vsyncadd [#allocation7], %s134
      %138 = dma.smem_to_hbm [#allocation6], 16, %s2, [#allocation7]
    $region17: #{tpu_custom_call.1} parent=1 // pred_fallthru
      _
    // Predicated region
    $region18: #{tpu_custom_call.1} parent=1 // pred_check
      _
    $region19: #{tpu_custom_call.1} parent=1 // pred_check_branch
      %140 = sbr.rel (0) target = $region21
    $region20: #{tpu_custom_call.1} parent=1 // pred_region
      %141 = dma.done [#allocation4], 16
    $region21: #{tpu_custom_call.1} parent=1 // pred_fallthru
      _
    // Predicated region
    $region22: #{tpu_custom_call.1} parent=1 // pred_check
      _
    $region23: #{tpu_custom_call.1} parent=1 // pred_check_branch
      %143 = sbr.rel (0) target = $region25
    $region24: #{tpu_custom_call.1} parent=1 // pred_region
      %144 = dma.done [#allocation7], 16
    $region25: #{tpu_custom_call.1} parent=1 // pred_fallthru
      _
    %145 = sfence
    %146 = vsyncpa [#allocation3], 1
    %147 = vsyncpa [#allocation4], 1
    %148 = vsyncpa [#allocation7], 1

</llo_original>
